<compile_context>
chip_gen: v7x
topology: tpu7x:2x2x1
jax: 0.10.0
libtpu: 0.0.40
codegen_flags: <defaults>
</compile_context>

<pallas_src>
import functools

import jax
import jax.numpy as jnp
import numpy as np
from jax.experimental import pallas as pl
from jax.experimental.pallas import tpu as pltpu

BN_EPS = 1e-5
_VMEM_BUDGET_BYTES = 48 * 1024 * 1024   # conservative across v5e/v6e (128 MiB) / v7x (64 MiB)


def _round_up(x, m):
    return (x + m - 1) // m * m


# ----------------------------------------------------------------- kernel ----

def _conv_bn_relu_kernel(a_ref, w_ref, g_ref, b_ref, o_ref, sum_sc, sq_sc,
                         *, m_valid, tile_hw):
    """One (Cout, K) @ (K, tile_hw) conv tile + BN batch-stat accumulation.

    The output block is the full (N, Cout, HoWo_p) array with a constant
    index_map, so it stays resident in VMEM across the whole (sequential) grid;
    the finalize step applies the folded BatchNorm affine + ReLU in place and
    the finished result is written to HBM exactly once.
    """
    n = pl.program_id(0)
    t = pl.program_id(1)

    @pl.when((n == 0) & (t == 0))
    def _():
        sum_sc[...] = jnp.zeros_like(sum_sc)
        sq_sc[...] = jnp.zeros_like(sq_sc)

    # bf16 x bf16 on the MXU, f32 accumulation.  The conv bias is intentionally
    # omitted: training-mode BatchNorm subtracts the per-channel batch mean,
    # which cancels a per-channel constant exactly.
    acc = jnp.dot(w_ref[...], a_ref[...], preferred_element_type=jnp.float32)

    # Per-channel batch statistics (cross-lane reduce).  Padded spatial columns
    # hold zero patches (and no bias), so they contribute exactly zero -> no
    # masking needed at any step.
    sum_sc[...] += jnp.sum(acc, axis=1, keepdims=True)
    sq_sc[...] += jnp.sum(acc * acc, axis=1, keepdims=True)

    # Stash the raw conv tile into the VMEM-resident output (lane-dense store:
    # offset is a multiple of 128 and the tile width is a multiple of 128).
    off = pl.multiple_of(t * tile_hw, 128)
    o_ref[n, :, pl.ds(off, tile_hw)] = acc

    @pl.when((n == pl.num_programs(0) - 1) & (t == pl.num_programs(1) - 1))
    def _():
        inv_m = jnp.float32(1.0 / m_valid)
        mean = sum_sc[...] * inv_m                              # (Cout, 1)
        # Biased (training-mode BN) variance; clamp guards E[y^2]-mean^2
        # cancellation.  TODO(synk): chunk/center the accumulation for very
        # large M if tighter inv_std accuracy is ever required.
        var = jnp.maximum(sq_sc[...] * inv_m - mean * mean, 0.0)
        scale = g_ref[...] * jax.lax.rsqrt(var + BN_EPS)        # gamma * inv_std
        shift = b_ref[...] - mean * scale                       # beta - mean*scale
        o_ref[...] = jnp.maximum(o_ref[...] * scale[None] + shift[None], 0.0)


# ---------------------------------------------------------------- wrapper ----

def _im2col(x, kh, kw, padding):
    """(N, Cin, H, W) -> patches (N, Cin*KH*KW, Ho*Wo).

    K is ordered (cin, kh, kw), matching torch's weight.reshape(Cout, Cin*KH*KW).
    """
    n, cin, h, w = x.shape
    xp = jnp.pad(x, ((0, 0), (0, 0), (padding, padding), (padding, padding)))
    ho = h + 2 * padding - kh + 1
    wo = w + 2 * padding - kw + 1
    taps = [xp[:, :, i:i + ho, j:j + wo] for i in range(kh) for j in range(kw)]
    pat = jnp.stack(taps, axis=2)                      # (N, Cin, KH*KW, Ho, Wo)
    return pat.reshape(n, cin * kh * kw, ho * wo), ho, wo


def conv_bn_relu(x, weight, bias, gamma, beta, padding, tile_hw_max=2048):
    del bias  # exactly cancelled by the batch-mean subtraction (training-mode BN)

    n, cin, h, w = x.shape
    cout, _, kh, kw = weight.shape
    k = cin * kh * kw

    # bf16 *before* im2col: halves the expanded-patch intermediate footprint.
    patches, ho, wo = _im2col(x.astype(jnp.bfloat16), kh, kw, padding)
    howo = ho * wo
    m_valid = n * howo

    # Lane axis = spatial (Ho*Wo), tiled in lane-dense chunks (multiple of 128).
    tile_hw = min(tile_hw_max, _round_up(howo, 128))
    howop = _round_up(howo, tile_hw)
    if howop != howo:
        patches = jnp.pad(patches, ((0, 0), (0, 0), (0, howop - howo)))

    w_mat = weight.reshape(cout, k).astype(jnp.bfloat16)        # (Cout, K)
    g_col = gamma.astype(jnp.float32).reshape(cout, 1)
    b_col = beta.astype(jnp.float32).reshape(cout, 1)

    # VMEM budget: resident f32 output + double-buffered bf16 patch tiles +
    # weights + slack.  TODO(synk): two-pass fallback above the budget.
    resident_bytes = n * cout * howop * 4
    working_bytes = 2 * k * tile_hw * 2 + 2 * cout * k * 2 + (2 << 20)
    vmem_needed = resident_bytes + working_bytes
    if vmem_needed > _VMEM_BUDGET_BYTES:
        raise NotImplementedError(
            f"VMEM-resident path needs ~{vmem_needed >> 20} MiB; "
            "two-pass fallback not implemented.")

    grid = (n, howop // tile_hw)
    out = pl.pallas_call(
        functools.partial(_conv_bn_relu_kernel, m_valid=m_valid, tile_hw=tile_hw),
        out_shape=jax.ShapeDtypeStruct((n, cout, howop), jnp.float32),
        grid_spec=pltpu.PrefetchScalarGridSpec(
            num_scalar_prefetch=0,
            grid=grid,
            in_specs=[
                # Patch tile: full (unpadded) K contraction extent, lane-dense
                # spatial tile; leading batch dim squeezed.
                pl.BlockSpec((None, k, tile_hw), lambda ni, ti: (ni, 0, ti)),
                # Weights / gamma / beta: full arrays, constant index (resident).
                # For large K*Cout, add pipeline_mode=pl.Buffered(1) to the
                # weight spec to single-buffer it.
                pl.BlockSpec((cout, k), lambda ni, ti: (0, 0)),
                pl.BlockSpec((cout, 1), lambda ni, ti: (0, 0)),
                pl.BlockSpec((cout, 1), lambda ni, ti: (0, 0)),
            ],
            # Full-array output block, constant index -> VMEM-resident for the
            # whole grid, single HBM writeback after the last step.
            out_specs=pl.BlockSpec((n, cout, howop), lambda ni, ti: (0, 0, 0)),
            scratch_shapes=[pltpu.VMEM((cout, 1), jnp.float32),
                            pltpu.VMEM((cout, 1), jnp.float32)],
        ),
        # Both axes carry the BN-stat accumulators and the resident output, so
        # they must stay sequential.  (v7x: per-core partial stats + a combine
        # step would restore two-TensorCore parallelism.)
        compiler_params=pltpu.CompilerParams(
            dimension_semantics=("arbitrary", "arbitrary"),
            vmem_limit_bytes=int(min(_VMEM_BUDGET_BYTES,
                                     max(vmem_needed * 2, 32 << 20))),
        ),
    )(patches, w_mat, g_col, b_col)

    # Drop spatial padding (no-op when howop == howo) and reshape to NCHW --
    # both metadata-only, no relayout pass over the output.
    return out[:, :, :howo].reshape(n, cout, ho, wo)


# -------------------------------------------------------------- reference ----

def reference(x, weight, bias, gamma, beta, padding):
    y = jax.lax.conv_general_dilated(
        x, weight, window_strides=(1, 1),
        padding=[(padding, padding), (padding, padding)],
        dimension_numbers=("NCHW", "OIHW", "NCHW"))
    y = y + bias.reshape(1, -1, 1, 1)
    mean = y.mean(axis=(0, 2, 3), keepdims=True)
    var = y.var(axis=(0, 2, 3), keepdims=True)        # biased, training-mode BN
    yhat = (y - mean) * jax.lax.rsqrt(var + BN_EPS)
    return jnp.maximum(yhat * gamma.reshape(1, -1, 1, 1)
                       + beta.reshape(1, -1, 1, 1), 0.0)


# ------------------------------------------------------------------- main ----

if __name__ == "__main__":
    in_channels, out_channels = 4, 8
    kernel_size, padding = 3, 1
    N, H, W = 2, 16, 16

    key = jax.random.PRNGKey(0)
    kx, kw_, kb = jax.random.split(key, 3)

    x = jax.random.normal(kx, (N, in_channels, H, W), dtype=jnp.float32)
    fan_in = in_channels * kernel_size * kernel_size
    bound = 1.0 / np.sqrt(fan_in)
    weight = jax.random.uniform(
        kw_, (out_channels, in_channels, kernel_size, kernel_size),
        minval=-bound, maxval=bound, dtype=jnp.float32)
    bias = jax.random.uniform(kb, (out_channels,), minval=-bound, maxval=bound,
                              dtype=jnp.float32)
    gamma = jnp.ones((out_channels,), jnp.float32)   # BatchNorm2d default weight
    beta = jnp.zeros((out_channels,), jnp.float32)   # BatchNorm2d default bias

    out = conv_bn_relu(x, weight, bias, gamma, beta, padding)
    out = jax.block_until_ready(out)

    ref = jax.block_until_ready(reference(x, weight, bias, gamma, beta, padding))
    max_err = float(jnp.max(jnp.abs(out - ref)))
    assert out.shape == (N, out_channels, H, W), out.shape
    assert max_err < 5e-2, f"max abs error {max_err}"

    print("KERNEL_OK")
</pallas_src>

<mosaic_0001>
module attributes {stable_mosaic.version = 11 : i64} {
  func.func @_conv_bn_relu_kernel(%arg0: i32, %arg1: i32, %arg2: memref<1x36x256xbf16, #tpu.memory_space<vmem>>, %arg3: memref<8x36xbf16, #tpu.memory_space<vmem>>, %arg4: memref<8x1xf32, #tpu.memory_space<vmem>>, %arg5: memref<8x1xf32, #tpu.memory_space<vmem>>, %arg6: memref<2x8x256xf32, #tpu.memory_space<vmem>>, %arg7: memref<8x1xf32, #tpu.memory_space<vmem>>, %arg8: memref<8x1xf32, #tpu.memory_space<vmem>>) attributes {dimension_semantics = [#tpu.dimension_semantics<arbitrary>, #tpu.dimension_semantics<arbitrary>], iteration_bounds = array<i64: 2, 1>, scalar_prefetch = 0 : i64, scratch_operands = 2 : i64, tpu.core_type = #tpu.core_type<tc>, window_params = [{transform_indices = @transform_0, window_bounds = array<i64: 1, 36, 256>}, {pipeline_mode = #tpu.pipeline_mode<synchronous>, transform_indices = @transform_1, window_bounds = array<i64: 8, 36>}, {pipeline_mode = #tpu.pipeline_mode<synchronous>, transform_indices = @transform_2, window_bounds = array<i64: 8, 1>}, {pipeline_mode = #tpu.pipeline_mode<synchronous>, transform_indices = @transform_3, window_bounds = array<i64: 8, 1>}, {pipeline_mode = #tpu.pipeline_mode<synchronous>, transform_indices = @transform_4, window_bounds = array<i64: 2, 8, 256>}]} {
    %c0_i32 = arith.constant 0 : i32
    %0 = arith.cmpi eq, %arg0, %c0_i32 : i32
    %c0_i32_0 = arith.constant 0 : i32
    %1 = arith.cmpi eq, %arg1, %c0_i32_0 : i32
    %2 = arith.andi %0, %1 : i1
    %3 = arith.extui %2 : i1 to i32
    %c0_i32_1 = arith.constant 0 : i32
    %4 = arith.cmpi ne, %3, %c0_i32_1 : i32
    scf.if %4 {
      %cst_19 = arith.constant 0.000000e+00 : f32
      %32 = vector.broadcast %cst_19 : f32 to vector<8x1xf32>
      %c0_20 = arith.constant 0 : index
      %c0_21 = arith.constant 0 : index
      %33 = vector.load %arg7[%c0_20, %c0_21] : memref<8x1xf32, #tpu.memory_space<vmem>>, vector<8x1xf32>
      tpu.vector_store %arg7[%c0_20, %c0_21], %32 {strides = array<i32>} : memref<8x1xf32, #tpu.memory_space<vmem>>, vector<8x1xf32>,
      %cst_22 = arith.constant 0.000000e+00 : f32
      %34 = vector.broadcast %cst_22 : f32 to vector<8x1xf32>
      %c0_23 = arith.constant 0 : index
      %c0_24 = arith.constant 0 : index
      %35 = vector.load %arg8[%c0_23, %c0_24] : memref<8x1xf32, #tpu.memory_space<vmem>>, vector<8x1xf32>
      tpu.vector_store %arg8[%c0_23, %c0_24], %34 {strides = array<i32>} : memref<8x1xf32, #tpu.memory_space<vmem>>, vector<8x1xf32>,
    } else {
    }
    %c0 = arith.constant 0 : index
    %c0_2 = arith.constant 0 : index
    %5 = vector.load %arg3[%c0, %c0_2] : memref<8x36xbf16, #tpu.memory_space<vmem>>, vector<8x36xbf16>
    %c0_3 = arith.constant 0 : index
    %c0_4 = arith.constant 0 : index
    %c0_5 = arith.constant 0 : index
    %6 = vector.load %arg2[%c0_3, %c0_4, %c0_5] : memref<1x36x256xbf16, #tpu.memory_space<vmem>>, vector<1x36x256xbf16>
    %7 = vector.shape_cast %6 : vector<1x36x256xbf16> to vector<36x256xbf16>
    %cst = arith.constant dense<0.000000e+00> : vector<8x256xf32>
    %8 = tpu.matmul %5, %7, %cst {dimension_numbers = #tpu.dot_dimension_numbers<[1], [0], [0], [1], [0, 0, 1, 1], [], []>} : vector<8x36xbf16>, vector<36x256xbf16>, vector<8x256xf32> -> vector<8x256xf32>
    %c0_6 = arith.constant 0 : index
    %c0_7 = arith.constant 0 : index
    %9 = vector.load %arg7[%c0_6, %c0_7] : memref<8x1xf32, #tpu.memory_space<vmem>>, vector<8x1xf32>
    %cst_8 = arith.constant dense<0.000000e+00> : vector<8xf32>
    %10 = vector.multi_reduction <add>, %8, %cst_8 [1] : vector<8x256xf32> to vector<8xf32>
    %11 = vector.shape_cast %10 : vector<8xf32> to vector<8x1xf32>
    %12 = arith.addf %9, %11 : vector<8x1xf32>
    %c0_9 = arith.constant 0 : index
    %c0_10 = arith.constant 0 : index
    %13 = vector.load %arg7[%c0_9, %c0_10] : memref<8x1xf32, #tpu.memory_space<vmem>>, vector<8x1xf32>
    tpu.vector_store %arg7[%c0_9, %c0_10], %12 {strides = array<i32>} : memref<8x1xf32, #tpu.memory_space<vmem>>, vector<8x1xf32>,
    %c0_11 = arith.constant 0 : index
    %c0_12 = arith.constant 0 : index
    %14 = vector.load %arg8[%c0_11, %c0_12] : memref<8x1xf32, #tpu.memory_space<vmem>>, vector<8x1xf32>
    %15 = arith.mulf %8, %8 : vector<8x256xf32>
    %cst_13 = arith.constant dense<0.000000e+00> : vector<8xf32>
    %16 = vector.multi_reduction <add>, %15, %cst_13 [1] : vector<8x256xf32> to vector<8xf32>
    %17 = vector.shape_cast %16 : vector<8xf32> to vector<8x1xf32>
    %18 = arith.addf %14, %17 : vector<8x1xf32>
    %c0_14 = arith.constant 0 : index
    %c0_15 = arith.constant 0 : index
    %19 = vector.load %arg8[%c0_14, %c0_15] : memref<8x1xf32, #tpu.memory_space<vmem>>, vector<8x1xf32>
    tpu.vector_store %arg8[%c0_14, %c0_15], %18 {strides = array<i32>} : memref<8x1xf32, #tpu.memory_space<vmem>>, vector<8x1xf32>,
    %c256_i32 = arith.constant 256 : i32
    %20 = arith.muli %arg1, %c256_i32 : i32
    %21 = tpu.assume_multiple %20, 128 : i32
    %22 = arith.index_cast %arg0 : i32 to index
    %c0_16 = arith.constant 0 : index
    %23 = arith.index_cast %21 : i32 to index
    %24 = vector.load %arg6[%22, %c0_16, %23] : memref<2x8x256xf32, #tpu.memory_space<vmem>>, vector<1x8x256xf32>
    %25 = vector.shape_cast %24 : vector<1x8x256xf32> to vector<8x256xf32>
    %26 = vector.shape_cast %8 : vector<8x256xf32> to vector<1x8x256xf32>
    tpu.vector_store %arg6[%22, %c0_16, %23], %26 {strides = array<i32>} : memref<2x8x256xf32, #tpu.memory_space<vmem>>, vector<1x8x256xf32>,
    %c1_i32 = arith.constant 1 : i32
    %27 = arith.cmpi eq, %arg0, %c1_i32 : i32
    %c0_i32_17 = arith.constant 0 : i32
    %28 = arith.cmpi eq, %arg1, %c0_i32_17 : i32
    %29 = arith.andi %27, %28 : i1
    %30 = arith.extui %29 : i1 to i32
    %c0_i32_18 = arith.constant 0 : i32
    %31 = arith.cmpi ne, %30, %c0_i32_18 : i32
    scf.if %31 {
      %c0_19 = arith.constant 0 : index
      %c0_20 = arith.constant 0 : index
      %32 = vector.load %arg7[%c0_19, %c0_20] : memref<8x1xf32, #tpu.memory_space<vmem>>, vector<8x1xf32>
      %cst_21 = arith.constant 0.001953125 : f32
      %33 = vector.broadcast %cst_21 : f32 to vector<8x1xf32>
      %34 = arith.mulf %32, %33 : vector<8x1xf32>
      %c0_22 = arith.constant 0 : index
      %c0_23 = arith.constant 0 : index
      %35 = vector.load %arg8[%c0_22, %c0_23] : memref<8x1xf32, #tpu.memory_space<vmem>>, vector<8x1xf32>
      %cst_24 = arith.constant 0.001953125 : f32
      %36 = vector.broadcast %cst_24 : f32 to vector<8x1xf32>
      %37 = arith.mulf %35, %36 : vector<8x1xf32>
      %38 = arith.mulf %34, %34 : vector<8x1xf32>
      %39 = arith.subf %37, %38 : vector<8x1xf32>
      %cst_25 = arith.constant 0.000000e+00 : f32
      %40 = vector.broadcast %cst_25 : f32 to vector<8x1xf32>
      %41 = arith.maximumf %39, %40 : vector<8x1xf32>
      %c0_26 = arith.constant 0 : index
      %c0_27 = arith.constant 0 : index
      %42 = vector.load %arg4[%c0_26, %c0_27] : memref<8x1xf32, #tpu.memory_space<vmem>>, vector<8x1xf32>
      %cst_28 = arith.constant 9.99999974E-6 : f32
      %43 = vector.broadcast %cst_28 : f32 to vector<8x1xf32>
      %44 = arith.addf %41, %43 : vector<8x1xf32>
      %45 = math.rsqrt %44 : vector<8x1xf32>
      %46 = arith.mulf %42, %45 : vector<8x1xf32>
      %c0_29 = arith.constant 0 : index
      %c0_30 = arith.constant 0 : index
      %47 = vector.load %arg5[%c0_29, %c0_30] : memref<8x1xf32, #tpu.memory_space<vmem>>, vector<8x1xf32>
      %48 = arith.mulf %34, %46 : vector<8x1xf32>
      %49 = arith.subf %47, %48 : vector<8x1xf32>
      %c0_31 = arith.constant 0 : index
      %c0_32 = arith.constant 0 : index
      %c0_33 = arith.constant 0 : index
      %50 = vector.load %arg6[%c0_31, %c0_32, %c0_33] : memref<2x8x256xf32, #tpu.memory_space<vmem>>, vector<2x8x256xf32>
      %51 = vector.shape_cast %46 : vector<8x1xf32> to vector<1x8x1xf32>
      %52 = vector.broadcast %51 : vector<1x8x1xf32> to vector<2x8x256xf32>
      %53 = arith.mulf %50, %52 : vector<2x8x256xf32>
      %54 = vector.shape_cast %49 : vector<8x1xf32> to vector<1x8x1xf32>
      %55 = vector.broadcast %54 : vector<1x8x1xf32> to vector<2x8x256xf32>
      %56 = arith.addf %53, %55 : vector<2x8x256xf32>
      %cst_34 = arith.constant 0.000000e+00 : f32
      %57 = vector.broadcast %cst_34 : f32 to vector<2x8x256xf32>
      %58 = arith.maximumf %56, %57 : vector<2x8x256xf32>
      %c0_35 = arith.constant 0 : index
      %c0_36 = arith.constant 0 : index
      %c0_37 = arith.constant 0 : index
      %59 = vector.load %arg6[%c0_35, %c0_36, %c0_37] : memref<2x8x256xf32, #tpu.memory_space<vmem>>, vector<2x8x256xf32>
      tpu.vector_store %arg6[%c0_35, %c0_36, %c0_37], %58 {strides = array<i32>} : memref<2x8x256xf32, #tpu.memory_space<vmem>>, vector<2x8x256xf32>,
    } else {
    }
    return
  }
  func.func @transform_0(%arg0: i32, %arg1: i32) -> (i32, i32, i32) {
    %c0_i32 = arith.constant 0 : i32
    %c0_i32_0 = arith.constant 0 : i32
    return %arg0, %c0_i32, %arg1 : i32, i32, i32
  }
  func.func @transform_1(%arg0: i32, %arg1: i32) -> (i32, i32) {
    %c0_i32 = arith.constant 0 : i32
    %c0_i32_0 = arith.constant 0 : i32
    %c0_i32_1 = arith.constant 0 : i32
    return %c0_i32, %c0_i32_0 : i32, i32
  }
  func.func @transform_2(%arg0: i32, %arg1: i32) -> (i32, i32) {
    %c0_i32 = arith.constant 0 : i32
    %c0_i32_0 = arith.constant 0 : i32
    %c0_i32_1 = arith.constant 0 : i32
    return %c0_i32, %c0_i32_0 : i32, i32
  }
  func.func @transform_3(%arg0: i32, %arg1: i32) -> (i32, i32) {
    %c0_i32 = arith.constant 0 : i32
    %c0_i32_0 = arith.constant 0 : i32
    %c0_i32_1 = arith.constant 0 : i32
    return %c0_i32, %c0_i32_0 : i32, i32
  }
  func.func @transform_4(%arg0: i32, %arg1: i32) -> (i32, i32, i32) {
    %c0_i32 = arith.constant 0 : i32
    %c0_i32_0 = arith.constant 0 : i32
    %c0_i32_1 = arith.constant 0 : i32
    %c0_i32_2 = arith.constant 0 : i32
    return %c0_i32, %c0_i32_0, %c0_i32_1 : i32, i32, i32
  }
}

</mosaic_0001>

<llo_original>
// kernel: tpu_custom_call.1
$region0: #{tpu_custom_call.1}
  #allocation0 [shape = 'u32[]', space=smem, size = 0x4, offset = 0x4, fixed_abs, tag = 'smem constant byte address 0x4 - core index']
  #allocation1 [shape = 'u32[144,128]{1,0:T(1,128)}', space=vmem, size = 0x12000, scoped, tag = 'internal scratch']
  #allocation2 [shape = 'f32[8,1]{1,0:T(8,128)}', space=vmem, size = 0x1000, scoped, tag = 'scratch operand']
  #allocation3 [shape = 'f32[8,1]{1,0:T(8,128)}', space=vmem, size = 0x1000, scoped, tag = 'scratch operand']
  %s0 = inlined_call_operand.vmem [shape: bf16[2,36,256], index: 0, kind: input, shape index: {}]
  %s1 = inlined_call_operand.vmem [shape: bf16[8,36], index: 1, kind: input, shape index: {}]
  %s2 = inlined_call_operand.vmem [shape: f32[8,1], index: 2, kind: input, shape index: {}]
  %s3 = inlined_call_operand.vmem [shape: f32[8,1], index: 3, kind: input, shape index: {}]
  %s4 = inlined_call_operand.hbm [shape: f32[2,8,256], index: 4, kind: output, shape index: {}]
  %s5 = sld [smem:[#allocation0]]
  $region57: #{tpu_custom_call.1} parent=0
    _
  %s7 = ssub.s32 1, %s5
  %s8 = scalar_select 0, %s7, %s5
  $region1: #{tpu_custom_call.1} parent=0
    #allocation4 [shape = 'u8[16384]{0}', space=vmem, size = 0x4000, scoped, tag = 'output window, operand 0, single buffered']
    #allocation5 [shape = 's32[2]{0}', space=sflag, size = 0x8, scoped, tag = 'scoped memory for tpu_custom_call.1']
    %9 = vsyncpa [#allocation5], 0
    loop: start=0, step=1, limit=4
    $region2: #{tpu_custom_call.1} parent=1 // loop_pre_header
      _
    $region3: #{tpu_custom_call.1} parent=1 // loop_header
      %s11 = sphi 0, %s15
      %p12 = scmp.ge.s32.totalorder %s11, 4
      %s18 = sphi 0, %s30
      %s19 = sphi 0, %s26
      %s20 = sphi 0, %s18
      %s21 = sphi 0, %s19
      %s22 = sphi 0, %s20
      %s23 = sphi 0, %s21
      %s35 = sphi 0, %s37
      %s38 = sphi 0, %s35
      %s39 = sphi 0, %s38
      %s55 = sphi 0, %s39
      %s59 = sphi 0, %s59
      %s61 = sphi 0, %s59
      %s62 = sphi 0, %s61
      %s76 = sphi 0, %s62
      %s80 = sphi 0, %s80
      %s82 = sphi 0, %s80
      %s83 = sphi 0, %s82
      %s97 = sphi 0, %s83
      %s101 = sphi 0, %s101
      %s103 = sphi 0, %s101
      %s104 = sphi 0, %s103
      %s118 = sphi 0, %s104
      %s122 = sphi 0, %s122
      %s124 = sphi 0, %s122
      %s125 = sphi 0, %s124
      %s139 = sphi 0, %s125
    $region4: #{tpu_custom_call.1} parent=1 // loop_header_branch
      %14 = sbr.rel (%p12) target = $region8
    $region5: #{tpu_custom_call.1} parent=1 // loop_body
      %s16 = ssub.s32 %s11, 1
      %s17 = ssub.s32 %s11, 2
      %s24 = sadd.s32 1, %s19
      %p25 = scmp.ge.s32.totalorder %s24, 1
      %s26 = scalar_select %p25, 0, %s24
      %s27 = sadd.s32 1, %s18
      %s28 = scalar_select %p25, %s27, %s18
      %p29 = scmp.ge.s32.totalorder %s28, 2
      %s30 = scalar_select %p29, 0, %s28
      %s31 = ssub.s32 %s18, %s30
      %s32 = ssub.s32 %s19, %s26
      %s33 = sor.u32 %s31, %s32
      %p34 = scmp.eq.s32.totalorder %s33, 0
      %s36 = sadd.s32 %s35, 1
      %s37 = scalar_select %p34, %s35, %s36
      %p40 = pneg %p34
      %p41 = scmp.eq.s32.totalorder %s11, 1
      %p42 = por %p40, %p41
      %p43 = scmp.ne.s32.totalorder %s35, %s38
      %p44 = scmp.eq.s32.totalorder %s11, 0
      %p45 = por %p43, %p44
      %p46 = scmp.ne.s32.totalorder %s35, %s38
      %p47 = scmp.eq.s32.totalorder %s16, 1
      %p48 = por %p46, %p47
      %p49 = scmp.ne.s32.totalorder %s38, %s39
      %p50 = scmp.eq.s32.totalorder %s16, 0
      %p51 = por %p49, %p50
      %p52 = scmp.ne.s32.totalorder %s38, %s39
      %p53 = scmp.eq.s32.totalorder %s17, 1
      %p54 = por %p52, %p53
      %p56 = scmp.ne.s32.totalorder %s39, %s55
      %p57 = scmp.eq.s32.totalorder %s17, 0
      %p58 = por %p56, %p57
      %s60 = sadd.s32 %s59, 1
      %p63 = scmp.eq.s32.totalorder %s11, 1
      %p64 = scmp.ne.s32.totalorder %s59, %s61
      %p65 = scmp.eq.s32.totalorder %s11, 0
      %p66 = por %p64, %p65
      %p67 = scmp.ne.s32.totalorder %s59, %s61
      %p68 = scmp.eq.s32.totalorder %s16, 1
      %p69 = por %p67, %p68
      %p70 = scmp.ne.s32.totalorder %s61, %s62
      %p71 = scmp.eq.s32.totalorder %s16, 0
      %p72 = por %p70, %p71
      %p73 = scmp.ne.s32.totalorder %s61, %s62
      %p74 = scmp.eq.s32.totalorder %s17, 1
      %p75 = por %p73, %p74
      %p77 = scmp.ne.s32.totalorder %s62, %s76
      %p78 = scmp.eq.s32.totalorder %s17, 0
      %p79 = por %p77, %p78
      %s81 = sadd.s32 %s80, 1
      %p84 = scmp.eq.s32.totalorder %s11, 1
      %p85 = scmp.ne.s32.totalorder %s80, %s82
      %p86 = scmp.eq.s32.totalorder %s11, 0
      %p87 = por %p85, %p86
      %p88 = scmp.ne.s32.totalorder %s80, %s82
      %p89 = scmp.eq.s32.totalorder %s16, 1
      %p90 = por %p88, %p89
      %p91 = scmp.ne.s32.totalorder %s82, %s83
      %p92 = scmp.eq.s32.totalorder %s16, 0
      %p93 = por %p91, %p92
      %p94 = scmp.ne.s32.totalorder %s82, %s83
      %p95 = scmp.eq.s32.totalorder %s17, 1
      %p96 = por %p94, %p95
      %p98 = scmp.ne.s32.totalorder %s83, %s97
      %p99 = scmp.eq.s32.totalorder %s17, 0
      %p100 = por %p98, %p99
      %s102 = sadd.s32 %s101, 1
      %p105 = scmp.eq.s32.totalorder %s11, 1
      %p106 = scmp.ne.s32.totalorder %s101, %s103
      %p107 = scmp.eq.s32.totalorder %s11, 0
      %p108 = por %p106, %p107
      %p109 = scmp.ne.s32.totalorder %s101, %s103
      %p110 = scmp.eq.s32.totalorder %s16, 1
      %p111 = por %p109, %p110
      %p112 = scmp.ne.s32.totalorder %s103, %s104
      %p113 = scmp.eq.s32.totalorder %s16, 0
      %p114 = por %p112, %p113
      %p115 = scmp.ne.s32.totalorder %s103, %s104
      %p116 = scmp.eq.s32.totalorder %s17, 1
      %p117 = por %p115, %p116
      %p119 = scmp.ne.s32.totalorder %s104, %s118
      %p120 = scmp.eq.s32.totalorder %s17, 0
      %p121 = por %p119, %p120
      %s123 = sadd.s32 %s122, 1
      %p126 = scmp.eq.s32.totalorder %s11, 1
      %p127 = scmp.ne.s32.totalorder %s122, %s124
      %p128 = scmp.eq.s32.totalorder %s11, 0
      %p129 = por %p127, %p128
      %p130 = scmp.ne.s32.totalorder %s122, %s124
      %p131 = scmp.eq.s32.totalorder %s16, 1
      %p132 = por %p130, %p131
      %p133 = scmp.ne.s32.totalorder %s124, %s125
      %p134 = scmp.eq.s32.totalorder %s16, 0
      %p135 = por %p133, %p134
      %p136 = scmp.ne.s32.totalorder %s124, %s125
      %p137 = scmp.eq.s32.totalorder %s17, 1
      %p138 = por %p136, %p137
      %p140 = scmp.ne.s32.totalorder %s125, %s139
      %p141 = scmp.eq.s32.totalorder %s17, 0
      %p142 = por %p140, %p141
      %p143 = scmp.le.s32.totalorder 1, %s11
      %p144 = scmp.lt.s32.totalorder %s11, 3
      %p145 = pnand %p143, %p144
      %p146 = pneg %p145
      // Predicated region
      $region9: #{tpu_custom_call.1} parent=5 // pred_check
        _
      $region10: #{tpu_custom_call.1} parent=5 // pred_check_branch
        %148 = sbr.rel (%p145) target = $region12
      $region11: #{tpu_custom_call.1} parent=5 // pred_region
        %s149 = ssub.s32 %s11, 1
        // Predicated region
        $region13: #{tpu_custom_call.1} parent=11 // pred_check
          %p150 = pneg %p72
        $region14: #{tpu_custom_call.1} parent=11 // pred_check_branch
          %152 = sbr.rel (%p150) target = $region16
        $region15: #{tpu_custom_call.1} parent=11 // pred_region
          _
        $region16: #{tpu_custom_call.1} parent=11 // pred_fallthru
          _
        // Predicated region
        $region17: #{tpu_custom_call.1} parent=11 // pred_check
          %p153 = pneg %p93
        $region18: #{tpu_custom_call.1} parent=11 // pred_check_branch
          %155 = sbr.rel (%p153) target = $region20
        $region19: #{tpu_custom_call.1} parent=11 // pred_region
          _
        $region20: #{tpu_custom_call.1} parent=11 // pred_fallthru
          _
        // Predicated region
        $region21: #{tpu_custom_call.1} parent=11 // pred_check
          %p156 = pneg %p114
        $region22: #{tpu_custom_call.1} parent=11 // pred_check_branch
          %158 = sbr.rel (%p156) target = $region24
        $region23: #{tpu_custom_call.1} parent=11 // pred_region
          _
        $region24: #{tpu_custom_call.1} parent=11 // pred_fallthru
          _
      $region12: #{tpu_custom_call.1} parent=5 // pred_fallthru
        _
      %p159 = scmp.lt.s32.totalorder %s11, 2
      // Predicated region
      $region25: #{tpu_custom_call.1} parent=5 // pred_check
        %p160 = pneg %p159
      $region26: #{tpu_custom_call.1} parent=5 // pred_check_branch
        %162 = sbr.rel (%p160) target = $region28
      $region27: #{tpu_custom_call.1} parent=5 // pred_region
        // Predicated region
        $region29: #{tpu_custom_call.1} parent=27 // pred_check
          %p163 = pneg %p45
        $region30: #{tpu_custom_call.1} parent=27 // pred_check_branch
          %165 = sbr.rel (%p163) target = $region32
        $region31: #{tpu_custom_call.1} parent=27 // pred_region
          %s166 = smul.u32 2, %s19
          %p167 = scmp.lt.s32.totalorder %s18, 1
          %s168 = scalar_select %p167, %s18, 1
          %p169 = scmp.lt.s32.totalorder %s166, 1
          %s170 = scalar_select %p169, %s166, 1
          %s171 = smul.addr %s168, 10
          %s172 = sadd.s32 %s170, %s171
          %s173 = smul.addr %s172, 4
          %s174 = scalar_lea.vmem %s0, %s173
          %s175 = smul.u32 2, %s19
        $region32: #{tpu_custom_call.1} parent=27 // pred_fallthru
          _
      $region28: #{tpu_custom_call.1} parent=5 // pred_fallthru
        _
      %p176 = scmp.le.s32.totalorder 1, %s11
      %p177 = scmp.lt.s32.totalorder %s11, 3
      %p178 = pnand %p176, %p177
      %p179 = pneg %p178
      // Predicated region
      $region33: #{tpu_custom_call.1} parent=5 // pred_check
        _
      $region34: #{tpu_custom_call.1} parent=5 // pred_check_branch
        %181 = sbr.rel (%p178) target = $region36
      $region35: #{tpu_custom_call.1} parent=5 // pred_region
        %s182 = ssub.s32 %s11, 1
        %s183 = smul.u32 2, %s21
        %p184 = scmp.lt.s32.totalorder %s20, 1
        %s185 = scalar_select %p184, %s20, 1
        %p186 = scmp.lt.s32.totalorder %s183, 1
        %s187 = scalar_select %p186, %s183, 1
        %s188 = smul.addr %s185, 10
        %s189 = sadd.s32 %s187, %s188
        %s190 = smul.addr %s189, 4
        %s191 = scalar_lea.vmem %s0, %s190
        %p192 = pneg %p51
        %p193 = pneg %p48
        %p194 = pneg %p72
        %p195 = pneg %p69
        %p196 = pneg %p93
        %p197 = pneg %p90
        %p198 = pneg %p114
        %p199 = pneg %p111
        %p200 = pneg %p135
        %p201 = pneg %p132
        %s202 = smul.u32 2, %s21
        %p203 = scmp.lt.s32.totalorder %s20, 1
        %s204 = scalar_select %p203, %s20, 1
        %p205 = scmp.lt.s32.totalorder %s202, 1
        %s206 = scalar_select %p205, %s202, 1
        %s207 = smul.addr %s204, 10
        %s208 = sadd.s32 %s206, %s207
        %s209 = smul.addr %s208, 4
        %s210 = scalar_lea.vmem %s0, %s209
        %s211 = smul.u32 2, %s21
        %p213 = scmp.eq.s32.totalorder %s20, 0
        %p214 = scmp.eq.s32.totalorder %s21, 0
        %p215 = pnand %p213, %p214
        %p216 = pneg %p215
        // Predicated region
        $region37: #{tpu_custom_call.1} parent=35 // pred_check
          _
        $region38: #{tpu_custom_call.1} parent=35 // pred_check_branch
          %218 = sbr.rel (%p215) target = $region40
        $region39: #{tpu_custom_call.1} parent=35 // pred_region
          %vm219 = vcmask 7168
          %220 = vst.msk [vmem:[#allocation2] sm:$0xff] %vm219, 0.0
          %221 = vst.msk [vmem:[#allocation3] sm:$0xff] %vm219, 0.0
        $region40: #{tpu_custom_call.1} parent=35 // pred_fallthru
          _
        %v222 = vld [vmem:[%s1] sm:$0xf]
        %v223 = vld [vmem:[%s210] sm:$0xff]
        %v224 = vld [vmem:[%s210 + $0x8] sm:$0xff]
        %v225 = vld [vmem:[%s210 + $0x10] sm:$0xff]
        %v226 = vld [vmem:[%s210 + $0x18] sm:$0xff]
        %v227 = vld [vmem:[%s210 + $0x20] sm:$0x33]
        %v233 = vunpack.c.l.b16 %v223
        %v234 = vunpack.c.h.b16 %v223
        %v235 = vunpack.c.l.b16 %v224
        %v236 = vunpack.c.h.b16 %v224
        %v237 = vunpack.c.l.b16 %v225
        %v238 = vunpack.c.h.b16 %v225
        %v239 = vunpack.c.l.b16 %v226
        %v240 = vunpack.c.h.b16 %v226
        %v241 = vunpack.c.l.b16 %v227
        %v242 = vunpack.c.h.b16 %v227
        %v243 = vpack.c.b16 %v235, %v233
        %v244 = vpack.c.b16 %v236, %v234
        %v245 = vpack.c.b16 %v239, %v237
        %v246 = vpack.c.b16 %v240, %v238
        %v247 = vpack.c.b16 %v241, %v241
        %v248 = vpack.c.b16 %v242, %v242
        %vm253 = vcmask 293888
        %v255 = vsel %vm253, %v222, 0
        %vm257 = vcmask 1041408
        %v259 = vsel %vm257, %v247, 0
        %v262 = vsel %vm257, %v248, 0
        %264 = vmatprep.subr.bf16.mxu0 %v244
        %265 = vmatpush1.bf16.msra.mxu0 %v243
        %266 = vmatprep.subr.bf16.mxu0 %v246
        %267 = vmatpush1.bf16.msra.mxu0 %v245
        %268 = vmatprep.subr.bf16.mxu0 %v262
        %269 = vmatpush1.bf16.msra.mxu0 %v259
        %270 = vmatprep.subr.bf16.mxu0 0
        %271 = vmatpush1.bf16.msra.mxu0 0
        %272 = vmatprep.subr.bf16.mxu0 0
        %273 = vmatpush1.bf16.msra.mxu0 0
        %274 = vmatprep.subr.bf16.mxu0 0
        %275 = vmatpush1.bf16.msra.mxu0 0
        %276 = vmatprep.subr.bf16.mxu0 0
        %277 = vmatpush1.bf16.msra.mxu0 0
        %278 = vmatprep.subr.bf16.mxu0 0
        %279 = vmatpush1.bf16.msra.mxu0 0
        %280 = vmatprep.subr.bf16.mxu0 0
        %281 = vmatpush1.bf16.msra.mxu0 0
        %282 = vmatprep.subr.bf16.mxu0 0
        %283 = vmatpush1.bf16.msra.mxu0 0
        %284 = vmatprep.subr.bf16.mxu0 0
        %285 = vmatpush1.bf16.msra.mxu0 0
        %286 = vmatprep.subr.bf16.mxu0 0
        %287 = vmatpush1.bf16.msra.mxu0 0
        %288 = vmatprep.subr.bf16.mxu0 0
        %289 = vmatpush1.bf16.msra.mxu0 0
        %290 = vmatprep.subr.bf16.mxu0 0
        %291 = vmatpush1.bf16.msra.mxu0 0
        %292 = vmatprep.subr.bf16.mxu0 0
        %293 = vmatpush1.bf16.msra.mxu0 0
        %294 = vmatprep.subr.bf16.mxu0 0
        %295 = vmatpush1.bf16.msra.mxu0 0
        %296 = vmatprep.mubr.bf16.mxu0 0
        %297 = vmatmul.mubr.bf16.gmra.mrb[0].mxu0 %v255
        %v298 = vpop.f32.mrb[0].mxu0
        %v299 = vadd.f32 0.0, %v298
        %v300 = vpop.f32.mrb[0].mxu0
        %v301 = vadd.f32 0.0, %v300
        %v302 = vpop.f32.mrb[0].mxu0
        %v303 = vpop.f32.mrb[0].mxu0
        %304 = vdwg.mxu0
        %v305 = vld [vmem:[#allocation2] sm:$0xff]
        %v306 = vadd.f32 %v299, %v301
        %307 = vadd.xlane.f32.xlu0 %v306
        %v308 = vpop.xlane.xlu0 %307
        %v309 = vadd.f32 %v305, %v308
        %vm310 = vcmask 7168
        %311 = vst.msk [vmem:[#allocation2] sm:$0xff] %vm310, %v309
        %v312 = vld [vmem:[#allocation3] sm:$0xff]
        %v313 = vmul.f32 %v299, %v299
        %v314 = vmul.f32 %v301, %v301
        %v315 = vadd.f32 %v313, %v314
        %316 = vadd.xlane.f32.xlu0 %v315
        %v317 = vpop.xlane.xlu0 %316
        %v318 = vadd.f32 %v312, %v317
        %319 = vst.msk [vmem:[#allocation3] sm:$0xff] %vm310, %v318
        %s320 = smul.u32 %s21, 256
        %s321 = sshra.s32 %s320, 7
        %s322 = sand.u32 %s320, 127
        %s323 = smul.u32 %s20, 2
        %s324 = sadd.s32 %s321, %s323
        %s325 = smul.addr %s324, 8
        %s326 = scalar_lea.vmem [#allocation4], %s325
        %327 = vst [vmem:[%s326] sm:$0xff] %v299
        %328 = vst [vmem:[%s326 + $0x8] sm:$0xff] %v301
        %p329 = scmp.eq.s32.totalorder %s20, 1
        %p330 = pnand %p329, %p214
        %p331 = pneg %p330
        // Predicated region
        $region41: #{tpu_custom_call.1} parent=35 // pred_check
          _
        $region42: #{tpu_custom_call.1} parent=35 // pred_check_branch
          %333 = sbr.rel (%p330) target = $region44
        $region43: #{tpu_custom_call.1} parent=35 // pred_region
          %v334 = vld [vmem:[#allocation2] sm:$0xff]
          %v335 = vmul.f32 %v334, 0.001953125
          %v336 = vld [vmem:[#allocation3] sm:$0xff]
          %v337 = vmul.f32 %v336, 0.001953125
          %v338 = vmul.f32 %v335, %v335
          %v339 = vsub.f32 %v337, %v338
          %v340 = vmax.f32 %v339, 0.0
          %v341 = vld [vmem:[%s2] sm:$0xff]
          %v342 = vadd.f32 %v340, 1e-05
          %v343 = vrsqrt.pop %v342
          %v344 = vmul.f32 %v341, %v343
          %v345 = vld [vmem:[%s3] sm:$0xff]
          %v346 = vmul.f32 %v335, %v344
          %v347 = vsub.f32 %v345, %v346
          %v348 = vld [vmem:[#allocation4] sm:$0xff]
          %v349 = vld [vmem:[#allocation4 + $0x8] sm:$0xff]
          %v350 = vld [vmem:[#allocation4 + $0x10] sm:$0xff]
          %v351 = vld [vmem:[#allocation4 + $0x18] sm:$0xff]
          %353 = vset.pattern.permute.xlu0 0
          %354 = vperm.xlu0 %353, %v344
          %v355 = vpop.permute.xlu0 %354
          %v357 = vmul.f32 %v348, %v355
          %v358 = vmul.f32 %v349, %v355
          %v359 = vmul.f32 %v350, %v355
          %v360 = vmul.f32 %v351, %v355
          %362 = vset.pattern.permute.xlu0 0
          %363 = vperm.xlu0 %362, %v347
          %v364 = vpop.permute.xlu0 %363
          %v366 = vadd.f32 %v357, %v364
          %v367 = vadd.f32 %v358, %v364
          %v368 = vadd.f32 %v359, %v364
          %v369 = vadd.f32 %v360, %v364
          %v370 = vmax.f32 %v366, 0.0
          %v371 = vmax.f32 %v367, 0.0
          %v372 = vmax.f32 %v368, 0.0
          %v373 = vmax.f32 %v369, 0.0
          %374 = vst [vmem:[#allocation4] sm:$0xff] %v370
          %375 = vst [vmem:[#allocation4 + $0x8] sm:$0xff] %v371
          %376 = vst [vmem:[#allocation4 + $0x10] sm:$0xff] %v372
          %377 = vst [vmem:[#allocation4 + $0x18] sm:$0xff] %v373
        $region44: #{tpu_custom_call.1} parent=35 // pred_fallthru
          _
        // Predicated region
        $region45: #{tpu_custom_call.1} parent=35 // pred_check
          %p378 = pneg %p132
        $region46: #{tpu_custom_call.1} parent=35 // pred_check_branch
          %380 = sbr.rel (%p378) target = $region48
        $region47: #{tpu_custom_call.1} parent=35 // pred_region
          %s382 = ssub.s32 512, 512
          %383 = vsyncadd [#allocation5], %s382
          %s384 = sshll.u32 [#allocation4], 4
          %s385 = int_to_ptr.vmem [resolvable:$true] %s384
          %390 = dma.vmem_to_hbm [thread:$0]  %s385, 512, %s4, [#allocation5], 256, 256, 16
        $region48: #{tpu_custom_call.1} parent=35 // pred_fallthru
          _
        // Predicated region
        $region49: #{tpu_custom_call.1} parent=35 // pred_check
          %p391 = pneg %p132
        $region50: #{tpu_custom_call.1} parent=35 // pred_check_branch
          %393 = sbr.rel (%p391) target = $region52
        $region51: #{tpu_custom_call.1} parent=35 // pred_region
          %394 = dma.done [#allocation5], 512
        $region52: #{tpu_custom_call.1} parent=35 // pred_fallthru
          _
      $region36: #{tpu_custom_call.1} parent=5 // pred_fallthru
        _
      %p395 = scmp.le.s32.totalorder 2, %s11
      // Predicated region
      $region53: #{tpu_custom_call.1} parent=5 // pred_check
        %p396 = pneg %p395
      $region54: #{tpu_custom_call.1} parent=5 // pred_check_branch
        %398 = sbr.rel (%p396) target = $region56
      $region55: #{tpu_custom_call.1} parent=5 // pred_region
        %s399 = ssub.s32 %s11, 2
      $region56: #{tpu_custom_call.1} parent=5 // pred_fallthru
        _
    $region6: #{tpu_custom_call.1} parent=1 // loop_footer
      %s15 = sadd.s32 1, %s11
    $region7: #{tpu_custom_call.1} parent=1 // loop_footer_branch
      %10 = sbr.rel target = $region3
    $region8: #{tpu_custom_call.1} parent=1 // loop_exit
      _
    %400 = vsyncpa [#allocation5], 1
    %s401 = scalar_lea.sflag [#allocation5], 1
    %402 = vsyncpa %s401, 1

</llo_original>
